<compile_context>
chip_gen: v6e
topology: v6e:2x2x1
jax: 0.10.0
libtpu: 0.0.40
codegen_flags: <defaults>
</compile_context>

<pallas_src>
import math
import functools

import numpy as np
import jax
import jax.numpy as jnp
from jax import lax
from jax.experimental import pallas as pl
from jax.experimental.pallas import tpu as pltpu


# ---------------------------------------------------------------------------
# Parameter (buffer) construction -- mirrors PeriodicPositionalEncoding.__init__
# ---------------------------------------------------------------------------
def build_periodic_pe(d_model, period=25, max_seq_len=600, dtype=jnp.float32):
    position = np.arange(0, period, dtype=np.float32)[:, None]                  # (period, 1)
    div_term = np.exp(np.arange(0, d_model, 2, dtype=np.float32)
                      * (-math.log(10000.0) / d_model))                         # (d_model/2,)
    pe = np.zeros((period, d_model), dtype=np.float32)
    pe[:, 0::2] = np.sin(position * div_term)
    pe[:, 1::2] = np.cos(position * div_term)
    repeat_num = max_seq_len // period + 1
    pe = np.tile(pe, (repeat_num, 1))[None, :, :]                               # (1, period*repeat, d_model)
    return jnp.asarray(pe, dtype=dtype)


# ---------------------------------------------------------------------------
# Kernels
# ---------------------------------------------------------------------------
def ppe_add_kernel(x_ref, pe_ref, o_ref):
    # eval-mode forward: x + pe (dropout is identity in eval).
    # x block is (tb, tl); pe block is (1, tl) -> broadcast over batch rows.
    o_ref[...] = (x_ref[...] + pe_ref[...]).astype(o_ref.dtype)


def _keep_mask(bits_u32, p):
    # bits_u32: uniform uint32 random bits. P(keep) = 1 - round(p*2^31)/2^31 ~= 1 - p.
    thresh = min(int(round(float(p) * (1 << 31))), (1 << 31) - 1)
    r31 = (bits_u32 >> 1).astype(jnp.int32)          # uniform in [0, 2^31)
    return r31 >= jnp.int32(thresh)


def ppe_add_dropout_hw_kernel(seed_ref, x_ref, pe_ref, o_ref, *, p):
    # train-mode forward using the hardware PRNG (bits come from a separate unit,
    # so the data path stays HBM-bound instead of VALU-bound).
    y = x_ref[...] + pe_ref[...]                      # compute in input dtype (bf16 ok on v6e/v7x)
    # Seed per grid step so the mask is deterministic and independent of core assignment.
    pltpu.prng_seed(seed_ref[0], pl.program_id(0), pl.program_id(1))
    bits = pltpu.bitcast(pltpu.prng_random_bits(y.shape), jnp.uint32)
    keep = _keep_mask(bits, p)
    scale = jnp.asarray(1.0 / (1.0 - p) if p < 1.0 else 0.0, dtype=y.dtype)
    o_ref[...] = jnp.where(keep, y * scale, jnp.zeros((), y.dtype)).astype(o_ref.dtype)


def ppe_add_dropout_sw_kernel(seed_ref, x_ref, pe_ref, o_ref, *, p):
    # Portable fallback (interpret / non-TPU backends only): short 2-round hash PRNG
    # built from plain jnp integer ops.
    y = x_ref[...] + pe_ref[...]
    shape = y.shape
    l_id = pl.program_id(0)
    b_id = pl.program_id(1)
    grow = (lax.broadcasted_iota(jnp.int32, shape, 0) + b_id * shape[0]).astype(jnp.uint32)
    gcol = (lax.broadcasted_iota(jnp.int32, shape, 1) + l_id * shape[1]).astype(jnp.uint32)
    h = grow * jnp.uint32(0x9E3779B1) + gcol \
        + seed_ref[0].astype(jnp.uint32) * jnp.uint32(0x85EBCA6B)
    h = (h ^ (h >> 16)) * jnp.uint32(0x7FEB352D)
    h = h ^ (h >> 15)
    keep = _keep_mask(h, p)
    scale = jnp.asarray(1.0 / (1.0 - p) if p < 1.0 else 0.0, dtype=y.dtype)
    o_ref[...] = jnp.where(keep, y * scale, jnp.zeros((), y.dtype)).astype(o_ref.dtype)


# ---------------------------------------------------------------------------
# Tiling helpers
# ---------------------------------------------------------------------------
def _chip_defaults():
    # Conservative defaults sized for v7x (64 MiB VMEM / TensorCore); bump block size
    # and scoped-VMEM budget on v5e/v6e (128 MiB VMEM) when detectable.
    target_block_bytes, vmem_limit = 2 << 20, 32 << 20
    try:
        vmem = getattr(pltpu.get_tpu_info(), "vmem_capacity_bytes", None)
        if vmem is not None and vmem >= (96 << 20):
            target_block_bytes, vmem_limit = 4 << 20, 64 << 20
    except Exception:
        pass
    return target_block_bytes, vmem_limit


def _choose_tiles(B, L, itemsize, target_block_bytes, min_grid_steps=8):
    """Pick (tb, tl): sublane-aligned batch tile, lane-dense (multiple of 128) row tile,
    sized near target_block_bytes, with >= min_grid_steps grid steps where possible."""
    sub = {1: 32, 2: 16, 4: 8}.get(itemsize, 8)
    row_bytes = max(L * itemsize, 1)
    tb = max(1, target_block_bytes // row_bytes)
    if tb >= B:
        tb = B                                        # full array dim: always legal
    else:
        tb = min(max(sub, (tb // sub) * sub), B)      # multiple of sublane tile (or == B)
    nb = pl.cdiv(B, tb)
    tl = max(128, min(L, (target_block_bytes // max(tb * itemsize, 1)) // 128 * 128))
    # Split the row further if the grid would starve the pipeline / second TensorCore.
    while nb * pl.cdiv(L, tl) < min_grid_steps and tl > 128:
        tl = max(128, ((tl // 2) // 128) * 128)
    return tb, tl


# ---------------------------------------------------------------------------
# Wrapper
# ---------------------------------------------------------------------------
def periodic_positional_encoding(x, pe, *, dropout_p=0.1, training=False, seed=0,
                                 target_block_bytes=None, min_grid_steps=8,
                                 use_hw_prng=None):
    """Forward pass of PeriodicPositionalEncoding: dropout(x + pe[:, :S, :]).

    x:  (B, S, D) float array
    pe: (1, max_len, D) precomputed buffer (max_len >= S), from build_periodic_pe.
    """
    B, S, D = x.shape
    itemsize = jnp.dtype(x.dtype).itemsize

    auto_tbb, vmem_limit = _chip_defaults()
    if target_block_bytes is None:
        target_block_bytes = auto_tbb
    if use_hw_prng is None:
        use_hw_prng = jax.default_backend() == "tpu"   # trace-time branch, not in-kernel

    # Lane-dense layout: collapse (S, D) -> L and zero-pad L to a multiple of 128 so
    # both kernels use unmasked, full-lane vector loads/stores on all generations.
    L0 = S * D
    L = ((L0 + 127) // 128) * 128
    x2 = x.reshape(B, L0)
    pe2 = pe[0, :S, :].astype(x.dtype).reshape(1, L0)
    if L != L0:
        x2 = jnp.pad(x2, ((0, 0), (0, L - L0)))
        pe2 = jnp.pad(pe2, ((0, 0), (0, L - L0)))

    tb, tl = _choose_tiles(B, L, itemsize, target_block_bytes, min_grid_steps)
    grid = (pl.cdiv(L, tl), pl.cdiv(B, tb))            # row-chunks outer, batch inner

    x_spec = pl.BlockSpec((tb, tl), lambda l, b, *_: (b, l))
    # TODO(synk): on v7x the pe operand could be single-buffered
    #             (pipeline_mode=pl.Buffered(1)) to reclaim one small VMEM buffer.
    pe_spec = pl.BlockSpec((1, tl), lambda l, b, *_: (0, l))
    out_spec = pl.BlockSpec((tb, tl), lambda l, b, *_: (b, l))

    cost = pl.CostEstimate(flops=2 * B * L, transcendentals=0,
                           bytes_accessed=int((2 * B * L + L) * itemsize))
    cparams = pltpu.CompilerParams(
        dimension_semantics=("parallel", "parallel"),   # all grid steps independent
        vmem_limit_bytes=vmem_limit)

    if (not training) or float(dropout_p) == 0.0:
        out = pl.pallas_call(
            ppe_add_kernel,
            out_shape=jax.ShapeDtypeStruct((B, L), x.dtype),
            grid_spec=pltpu.PrefetchScalarGridSpec(
                num_scalar_prefetch=0, grid=grid,
                in_specs=[x_spec, pe_spec], out_specs=out_spec),
            compiler_params=cparams, cost_estimate=cost,
        )(x2, pe2)
    else:
        kern = ppe_add_dropout_hw_kernel if use_hw_prng else ppe_add_dropout_sw_kernel
        kernel = functools.partial(kern, p=float(dropout_p))
        seed_arr = jnp.asarray([seed], dtype=jnp.int32)
        out = pl.pallas_call(
            kernel,
            out_shape=jax.ShapeDtypeStruct((B, L), x.dtype),
            grid_spec=pltpu.PrefetchScalarGridSpec(
                num_scalar_prefetch=1, grid=grid,      # seed lands in SMEM
                in_specs=[x_spec, pe_spec], out_specs=out_spec),
            compiler_params=cparams, cost_estimate=cost,
        )(seed_arr, x2, pe2)

    if L != L0:
        out = out[:, :L0]
    return out.reshape(B, S, D)


# ---------------------------------------------------------------------------
# Demo / self-check
# ---------------------------------------------------------------------------
if __name__ == "__main__":
    key = jax.random.PRNGKey(0)

    B, S, D = 2, 8, 32                 # batch, seq, d_model
    period, max_seq_len = 25, 600

    x = jax.random.normal(key, (B, S, D), dtype=jnp.float32)
    pe = build_periodic_pe(D, period=period, max_seq_len=max_seq_len)
    ref = x + pe[:, :S, :]

    # Eval mode (dropout = identity): must match x + pe[:, :S, :].
    out_eval = jax.block_until_ready(periodic_positional_encoding(x, pe, training=False))
    assert out_eval.shape == (B, S, D) and out_eval.dtype == x.dtype
    assert jnp.allclose(out_eval, ref, atol=1e-6, rtol=1e-6)

    # Padded (non-lane-dense) path: S*D not a multiple of 128.
    S2, D2 = 7, 24
    x_pad = jax.random.normal(jax.random.PRNGKey(1), (B, S2, D2), dtype=jnp.float32)
    pe_pad = build_periodic_pe(D2, period=period, max_seq_len=max_seq_len)
    out_pad = jax.block_until_ready(
        periodic_positional_encoding(x_pad, pe_pad, training=False))
    assert jnp.allclose(out_pad, x_pad + pe_pad[:, :S2, :], atol=1e-6, rtol=1e-6)

    # Train mode: dropout with p=0.1.  RNG stream differs from torch by construction,
    # but semantics -- zeroing + 1/(1-p) scaling of kept values -- match.
    p = 0.1
    out_train = jax.block_until_ready(
        periodic_positional_encoding(x, pe, dropout_p=p, training=True, seed=1234))
    assert out_train.shape == (B, S, D) and out_train.dtype == x.dtype
    scaled = ref / (1.0 - p)
    match_kept = jnp.isclose(out_train, scaled, atol=1e-5, rtol=1e-5)
    match_drop = out_train == 0.0
    assert bool(jnp.all(match_kept | match_drop))
    drop_frac = float(jnp.mean(match_drop.astype(jnp.float32)))
    assert 0.0 < drop_frac < 0.4, f"dropout fraction looks broken: {drop_frac}"

    print("KERNEL_OK")
</pallas_src>

<mosaic_0001>
module attributes {stable_mosaic.version = 11 : i64} {
  func.func @ppe_add_kernel(%arg0: i32, %arg1: i32, %arg2: memref<2x128xf32, #tpu.memory_space<vmem>>, %arg3: memref<1x128xf32, #tpu.memory_space<vmem>>, %arg4: memref<2x128xf32, #tpu.memory_space<vmem>>) attributes {dimension_semantics = [#tpu.dimension_semantics<parallel>, #tpu.dimension_semantics<parallel>], iteration_bounds = array<i64: 2, 1>, scalar_prefetch = 0 : i64, scratch_operands = 0 : i64, tpu.core_type = #tpu.core_type<tc>, window_params = [{transform_indices = @transform_0, window_bounds = array<i64: 2, 128>}, {transform_indices = @transform_1, window_bounds = array<i64: 1, 128>}, {transform_indices = @transform_2, window_bounds = array<i64: 2, 128>}]} {
    %c0 = arith.constant 0 : index
    %c0_0 = arith.constant 0 : index
    %0 = vector.load %arg2[%c0, %c0_0] : memref<2x128xf32, #tpu.memory_space<vmem>>, vector<2x128xf32>
    %c0_1 = arith.constant 0 : index
    %c0_2 = arith.constant 0 : index
    %1 = vector.load %arg3[%c0_1, %c0_2] : memref<1x128xf32, #tpu.memory_space<vmem>>, vector<1x128xf32>
    %2 = vector.broadcast %1 : vector<1x128xf32> to vector<2x128xf32>
    %3 = arith.addf %0, %2 : vector<2x128xf32>
    %c0_3 = arith.constant 0 : index
    %c0_4 = arith.constant 0 : index
    %4 = vector.load %arg4[%c0_3, %c0_4] : memref<2x128xf32, #tpu.memory_space<vmem>>, vector<2x128xf32>
    tpu.vector_store %arg4[%c0_3, %c0_4], %3 {strides = array<i32>} : memref<2x128xf32, #tpu.memory_space<vmem>>, vector<2x128xf32>,
    return
  }
  func.func @transform_0(%arg0: i32, %arg1: i32) -> (i32, i32) {
    %c0_i32 = arith.constant 0 : i32
    return %arg1, %arg0 : i32, i32
  }
  func.func @transform_1(%arg0: i32, %arg1: i32) -> (i32, i32) {
    %c0_i32 = arith.constant 0 : i32
    %c0_i32_0 = arith.constant 0 : i32
    return %c0_i32, %arg0 : i32, i32
  }
  func.func @transform_2(%arg0: i32, %arg1: i32) -> (i32, i32) {
    %c0_i32 = arith.constant 0 : i32
    return %arg1, %arg0 : i32, i32
  }
}

</mosaic_0001>

<llo_original>
// kernel: tpu_custom_call.1
$region0: #{tpu_custom_call.1}
  #allocation0 [shape = 'u32[]', space=smem, size = 0x4, offset = 0x4, fixed_abs, tag = 'smem constant byte address 0x4 - core index']
  #allocation1 [shape = 'u32[144,128]{1,0:T(1,128)}', space=vmem, size = 0x12000, scoped, tag = 'internal scratch']
  %s0 = inlined_call_operand.hbm [shape: f32[2,256], index: 0, kind: input, shape index: {}]
  %s1 = inlined_call_operand.hbm [shape: f32[1,256], index: 1, kind: input, shape index: {}]
  %s2 = inlined_call_operand.hbm [shape: f32[2,256], index: 2, kind: output, shape index: {}]
  %s3 = sld [smem:[#allocation0]]
  $region49: #{tpu_custom_call.1} parent=0
    _
  %s5 = ssub.s32 1, %s3
  %s6 = scalar_select 0, %s5, %s3
  $region1: #{tpu_custom_call.1} parent=0
    #allocation2 [shape = 'u8[2048]{0}', space=vmem, size = 0x800, scoped, tag = 'input window, operand 0']
    #allocation3 [shape = 's32[2]{0}', space=sflag, size = 0x8, scoped, tag = 'scoped memory for tpu_custom_call.1']
    #allocation4 [shape = 's32[2]{0}', space=sflag, size = 0x8, scoped, tag = 'scoped memory for tpu_custom_call.1']
    #allocation5 [shape = 'u8[1024]{0}', space=vmem, size = 0x400, scoped, tag = 'input window, operand 1']
    #allocation6 [shape = 's32[2]{0}', space=sflag, size = 0x8, scoped, tag = 'scoped memory for tpu_custom_call.1']
    #allocation7 [shape = 'u8[2048]{0}', space=vmem, size = 0x800, scoped, tag = 'output window, operand 0']
    %7 = vsyncpa [#allocation3], 0
    %s8 = scalar_lea.sflag [#allocation3], 1
    %9 = vsyncpa %s8, 0
    %10 = vsyncpa [#allocation6], 0
    %s11 = scalar_lea.sflag [#allocation6], 1
    %12 = vsyncpa %s11, 0
    %13 = vsyncpa [#allocation4], 0
    %s14 = scalar_lea.sflag [#allocation4], 1
    %15 = vsyncpa %s14, 0
    loop: start=0, step=1, limit=4
    $region2: #{tpu_custom_call.1} parent=1 // loop_pre_header
      _
    $region3: #{tpu_custom_call.1} parent=1 // loop_header
      %s17 = sphi 0, %s21
      %p18 = scmp.ge.s32.totalorder %s17, 4
      %s24 = sphi 0, %s36
      %s25 = sphi 0, %s32
      %s26 = sphi 0, %s24
      %s27 = sphi 0, %s25
      %s28 = sphi 0, %s26
      %s29 = sphi 0, %s27
      %s41 = sphi 0, %s43
      %s44 = sphi 0, %s41
      %s45 = sphi 0, %s44
      %s61 = sphi 0, %s45
      %s67 = sphi 0, %s69
      %s70 = sphi 0, %s67
      %s71 = sphi 0, %s70
      %s87 = sphi 0, %s71
      %s95 = sphi 0, %s97
      %s98 = sphi 0, %s95
      %s99 = sphi 0, %s98
      %s115 = sphi 0, %s99
    $region4: #{tpu_custom_call.1} parent=1 // loop_header_branch
      %20 = sbr.rel (%p18) target = $region8
    $region5: #{tpu_custom_call.1} parent=1 // loop_body
      %s22 = ssub.s32 %s17, 1
      %s23 = ssub.s32 %s17, 2
      %s30 = sadd.s32 1, %s25
      %p31 = scmp.ge.s32.totalorder %s30, 1
      %s32 = scalar_select %p31, 0, %s30
      %s33 = sadd.s32 1, %s24
      %s34 = scalar_select %p31, %s33, %s24
      %p35 = scmp.ge.s32.totalorder %s34, 2
      %s36 = scalar_select %p35, 0, %s34
      %s37 = ssub.s32 %s25, %s32
      %s38 = ssub.s32 %s24, %s36
      %s39 = sor.u32 %s37, %s38
      %p40 = scmp.eq.s32.totalorder %s39, 0
      %s42 = sadd.s32 %s41, 1
      %s43 = scalar_select %p40, %s41, %s42
      %p46 = pneg %p40
      %p47 = scmp.eq.s32.totalorder %s17, 1
      %p48 = por %p46, %p47
      %p49 = scmp.ne.s32.totalorder %s41, %s44
      %p50 = scmp.eq.s32.totalorder %s17, 0
      %p51 = por %p49, %p50
      %p52 = scmp.ne.s32.totalorder %s41, %s44
      %p53 = scmp.eq.s32.totalorder %s22, 1
      %p54 = por %p52, %p53
      %p55 = scmp.ne.s32.totalorder %s44, %s45
      %p56 = scmp.eq.s32.totalorder %s22, 0
      %p57 = por %p55, %p56
      %p58 = scmp.ne.s32.totalorder %s44, %s45
      %p59 = scmp.eq.s32.totalorder %s23, 1
      %p60 = por %p58, %p59
      %p62 = scmp.ne.s32.totalorder %s45, %s61
      %p63 = scmp.eq.s32.totalorder %s23, 0
      %p64 = por %p62, %p63
      %s65 = ssub.s32 %s24, %s36
      %p66 = scmp.eq.s32.totalorder %s65, 0
      %s68 = sadd.s32 %s67, 1
      %s69 = scalar_select %p66, %s67, %s68
      %p72 = pneg %p66
      %p73 = scmp.eq.s32.totalorder %s17, 1
      %p74 = por %p72, %p73
      %p75 = scmp.ne.s32.totalorder %s67, %s70
      %p76 = scmp.eq.s32.totalorder %s17, 0
      %p77 = por %p75, %p76
      %p78 = scmp.ne.s32.totalorder %s67, %s70
      %p79 = scmp.eq.s32.totalorder %s22, 1
      %p80 = por %p78, %p79
      %p81 = scmp.ne.s32.totalorder %s70, %s71
      %p82 = scmp.eq.s32.totalorder %s22, 0
      %p83 = por %p81, %p82
      %p84 = scmp.ne.s32.totalorder %s70, %s71
      %p85 = scmp.eq.s32.totalorder %s23, 1
      %p86 = por %p84, %p85
      %p88 = scmp.ne.s32.totalorder %s71, %s87
      %p89 = scmp.eq.s32.totalorder %s23, 0
      %p90 = por %p88, %p89
      %s91 = ssub.s32 %s25, %s32
      %s92 = ssub.s32 %s24, %s36
      %s93 = sor.u32 %s91, %s92
      %p94 = scmp.eq.s32.totalorder %s93, 0
      %s96 = sadd.s32 %s95, 1
      %s97 = scalar_select %p94, %s95, %s96
      %p100 = pneg %p94
      %p101 = scmp.eq.s32.totalorder %s17, 1
      %p102 = por %p100, %p101
      %p103 = scmp.ne.s32.totalorder %s95, %s98
      %p104 = scmp.eq.s32.totalorder %s17, 0
      %p105 = por %p103, %p104
      %p106 = scmp.ne.s32.totalorder %s95, %s98
      %p107 = scmp.eq.s32.totalorder %s22, 1
      %p108 = por %p106, %p107
      %p109 = scmp.ne.s32.totalorder %s98, %s99
      %p110 = scmp.eq.s32.totalorder %s22, 0
      %p111 = por %p109, %p110
      %p112 = scmp.ne.s32.totalorder %s98, %s99
      %p113 = scmp.eq.s32.totalorder %s23, 1
      %p114 = por %p112, %p113
      %p116 = scmp.ne.s32.totalorder %s99, %s115
      %p117 = scmp.eq.s32.totalorder %s23, 0
      %p118 = por %p116, %p117
      %p119 = scmp.le.s32.totalorder 1, %s17
      %p120 = scmp.lt.s32.totalorder %s17, 3
      %p121 = pnand %p119, %p120
      %p122 = pneg %p121
      // Predicated region
      $region9: #{tpu_custom_call.1} parent=5 // pred_check
        _
      $region10: #{tpu_custom_call.1} parent=5 // pred_check_branch
        %124 = sbr.rel (%p121) target = $region12
      $region11: #{tpu_custom_call.1} parent=5 // pred_region
        %s125 = ssub.s32 %s17, 1
      $region12: #{tpu_custom_call.1} parent=5 // pred_fallthru
        _
      %p126 = scmp.lt.s32.totalorder %s17, 2
      // Predicated region
      $region13: #{tpu_custom_call.1} parent=5 // pred_check
        %p127 = pneg %p126
      $region14: #{tpu_custom_call.1} parent=5 // pred_check_branch
        %129 = sbr.rel (%p127) target = $region16
      $region15: #{tpu_custom_call.1} parent=5 // pred_region
        // Predicated region
        $region17: #{tpu_custom_call.1} parent=15 // pred_check
          %p130 = pneg %p51
        $region18: #{tpu_custom_call.1} parent=15 // pred_check_branch
          %132 = sbr.rel (%p130) target = $region20
        $region19: #{tpu_custom_call.1} parent=15 // pred_region
          %s133 = sand.u32 %s41, 1
          %s134 = scalar_lea.sflag [#allocation3], %s133
          %s135 = sand.u32 %s41, 1
          %s136 = smul.addr %s135, 2
          %s137 = scalar_lea.vmem [#allocation2], %s136
          %s139 = ssub.s32 32, 32
          %140 = vsyncadd %s134, %s139
          %s141 = smul.addr %s25, 2
          %s142 = sadd.s32 %s24, %s141
          %s143 = smul.addr %s142, 32
          %s144 = scalar_lea.hbm %s0, %s143
          %s146 = sshll.u32 %s137, 4
          %s147 = int_to_ptr.vmem [resolvable:$true] %s146
          %149 = dma.hbm_to_vmem [thread:$0]  %s144, 32, %s147, %s134
        $region20: #{tpu_custom_call.1} parent=15 // pred_fallthru
          _
        // Predicated region
        $region21: #{tpu_custom_call.1} parent=15 // pred_check
          %p150 = pneg %p77
        $region22: #{tpu_custom_call.1} parent=15 // pred_check_branch
          %152 = sbr.rel (%p150) target = $region24
        $region23: #{tpu_custom_call.1} parent=15 // pred_region
          %s153 = sand.u32 %s67, 1
          %s154 = scalar_lea.sflag [#allocation6], %s153
          %s155 = sand.u32 %s67, 1
          %s156 = scalar_lea.vmem [#allocation5], %s155
          %s158 = ssub.s32 16, 16
          %159 = vsyncadd %s154, %s158
          %s160 = smul.addr %s24, 16
          %s161 = scalar_lea.hbm %s1, %s160
          %s163 = sshll.u32 %s156, 4
          %s164 = int_to_ptr.vmem [resolvable:$true] %s163
          %166 = dma.hbm_to_vmem [thread:$0]  %s161, 16, %s164, %s154
        $region24: #{tpu_custom_call.1} parent=15 // pred_fallthru
          _
      $region16: #{tpu_custom_call.1} parent=5 // pred_fallthru
        _
      %p167 = scmp.le.s32.totalorder 1, %s17
      %p168 = scmp.lt.s32.totalorder %s17, 3
      %p169 = pnand %p167, %p168
      %p170 = pneg %p169
      // Predicated region
      $region25: #{tpu_custom_call.1} parent=5 // pred_check
        _
      $region26: #{tpu_custom_call.1} parent=5 // pred_check_branch
        %172 = sbr.rel (%p169) target = $region28
      $region27: #{tpu_custom_call.1} parent=5 // pred_region
        %s173 = ssub.s32 %s17, 1
        %s174 = sand.u32 %s44, 1
        %s175 = scalar_lea.sflag [#allocation3], %s174
        %s176 = sand.u32 %s44, 1
        %s177 = smul.addr %s176, 2
        %s178 = scalar_lea.vmem [#allocation2], %s177
        // Predicated region
        $region29: #{tpu_custom_call.1} parent=27 // pred_check
          %p179 = pneg %p57
        $region30: #{tpu_custom_call.1} parent=27 // pred_check_branch
          %181 = sbr.rel (%p179) target = $region32
        $region31: #{tpu_custom_call.1} parent=27 // pred_region
          %182 = dma.done %s175, 32
        $region32: #{tpu_custom_call.1} parent=27 // pred_fallthru
          _
        %s183 = sand.u32 %s70, 1
        %s184 = scalar_lea.sflag [#allocation6], %s183
        %s185 = sand.u32 %s70, 1
        %s186 = scalar_lea.vmem [#allocation5], %s185
        // Predicated region
        $region33: #{tpu_custom_call.1} parent=27 // pred_check
          %p187 = pneg %p83
        $region34: #{tpu_custom_call.1} parent=27 // pred_check_branch
          %189 = sbr.rel (%p187) target = $region36
        $region35: #{tpu_custom_call.1} parent=27 // pred_region
          %190 = dma.done %s184, 16
        $region36: #{tpu_custom_call.1} parent=27 // pred_fallthru
          _
        %s191 = sand.u32 %s44, 1
        %s192 = scalar_lea.sflag [#allocation3], %s191
        %s193 = sand.u32 %s44, 1
        %s194 = smul.addr %s193, 2
        %s195 = scalar_lea.vmem [#allocation2], %s194
        %p196 = pneg %p57
        %p197 = pneg %p54
        %s198 = sand.u32 %s70, 1
        %s199 = scalar_lea.sflag [#allocation6], %s198
        %s200 = sand.u32 %s70, 1
        %s201 = scalar_lea.vmem [#allocation5], %s200
        %p202 = pneg %p83
        %p203 = pneg %p80
        %p204 = pneg %p111
        %p205 = pneg %p108
        %s206 = sand.u32 %s98, 1
        %s207 = scalar_lea.sflag [#allocation4], %s206
        %s208 = sand.u32 %s98, 1
        %s209 = smul.addr %s208, 2
        %s210 = scalar_lea.vmem [#allocation7], %s209
        %v211 = vld [vmem:[%s178] sm:$0x3]
        %v212 = vld [vmem:[%s186] sm:$0x1]
        %v214 = vlaneseq
        %v215 = vshrl.u32 %v214, 7
        %v216 = vsub.s32 0, %v215
        %v217 = vrot.slane %v212, %v216
        %v219 = vadd.f32 %v211, %v217
        %220 = vst [vmem:[%s210] sm:$0x3] %v219
        %s221 = sand.u32 %s98, 1
        %s222 = scalar_lea.sflag [#allocation4], %s221
        %s223 = sand.u32 %s98, 1
        %s224 = smul.addr %s223, 2
        %s225 = scalar_lea.vmem [#allocation7], %s224
        // Predicated region
        $region37: #{tpu_custom_call.1} parent=27 // pred_check
          %p226 = pneg %p108
        $region38: #{tpu_custom_call.1} parent=27 // pred_check_branch
          %228 = sbr.rel (%p226) target = $region40
        $region39: #{tpu_custom_call.1} parent=27 // pred_region
          %s230 = ssub.s32 32, 32
          %231 = vsyncadd %s222, %s230
          %s232 = smul.addr %s27, 2
          %s233 = sadd.s32 %s26, %s232
          %s234 = smul.addr %s233, 32
          %s235 = scalar_lea.hbm %s2, %s234
          %s237 = sshll.u32 %s225, 4
          %s238 = int_to_ptr.vmem [resolvable:$true] %s237
          %240 = dma.vmem_to_hbm [thread:$0]  %s238, 32, %s235, %s222
        $region40: #{tpu_custom_call.1} parent=27 // pred_fallthru
          _
      $region28: #{tpu_custom_call.1} parent=5 // pred_fallthru
        _
      %p241 = scmp.le.s32.totalorder 2, %s17
      // Predicated region
      $region41: #{tpu_custom_call.1} parent=5 // pred_check
        %p242 = pneg %p241
      $region42: #{tpu_custom_call.1} parent=5 // pred_check_branch
        %244 = sbr.rel (%p242) target = $region44
      $region43: #{tpu_custom_call.1} parent=5 // pred_region
        %s245 = ssub.s32 %s17, 2
        // Predicated region
        $region45: #{tpu_custom_call.1} parent=43 // pred_check
          %p246 = pneg %p114
        $region46: #{tpu_custom_call.1} parent=43 // pred_check_branch
          %248 = sbr.rel (%p246) target = $region48
        $region47: #{tpu_custom_call.1} parent=43 // pred_region
          %s249 = sand.u32 %s99, 1
          %s250 = scalar_lea.sflag [#allocation4], %s249
          %s251 = sand.u32 %s99, 1
          %s252 = smul.addr %s251, 2
          %s253 = scalar_lea.vmem [#allocation7], %s252
          %254 = dma.done %s250, 32
        $region48: #{tpu_custom_call.1} parent=43 // pred_fallthru
          _
      $region44: #{tpu_custom_call.1} parent=5 // pred_fallthru
        _
    $region6: #{tpu_custom_call.1} parent=1 // loop_footer
      %s21 = sadd.s32 1, %s17
    $region7: #{tpu_custom_call.1} parent=1 // loop_footer_branch
      %16 = sbr.rel target = $region3
    $region8: #{tpu_custom_call.1} parent=1 // loop_exit
      _
    %255 = vsyncpa [#allocation3], 1
    %s256 = scalar_lea.sflag [#allocation3], 1
    %257 = vsyncpa %s256, 1
    %258 = vsyncpa [#allocation6], 1
    %s259 = scalar_lea.sflag [#allocation6], 1
    %260 = vsyncpa %s259, 1
    %261 = vsyncpa [#allocation4], 1
    %s262 = scalar_lea.sflag [#allocation4], 1
    %263 = vsyncpa %s262, 1

</llo_original>
